<compile_context>
chip_gen: v7x
topology: tpu7x:2x2x1
jax: 0.10.0
libtpu: 0.0.40
codegen_flags: <defaults>
</compile_context>

<pallas_src>
import jax
import jax.numpy as jnp
from jax.experimental import pallas as pl
from jax.experimental.pallas import tpu as pltpu

_LANE = 512            # lane-dense block width (multiple of 128 -> unmasked vst)
_MAX_BLOCK_ROWS = 1024  # sublane-dense block height; 1024x512 f32 = 2 MiB/buffer


def _scale_half_kernel(x_ref, o_ref):
    # x * sigmoid(0) == x * 0.5 (exact): one VPU multiply per vreg,
    # no EUP exp, no add/divide.
    o_ref[...] = x_ref[...] * 0.5


def model_forward(x1: jax.Array) -> jax.Array:
    """Equivalent of Model.forward: x1.reshape(1, -1) * sigmoid(0)."""
    dtype = x1.dtype
    total = x1.size

    if total % _LANE == 0 and total >= _LANE * 8:
        # Large-N tiled path: sublane- and lane-dense 2-D blocks, parallel grid.
        rows = total // _LANE
        block_rows = rows if rows <= _MAX_BLOCK_ROWS else _MAX_BLOCK_ROWS
        x2d = x1.reshape(rows, _LANE)
        out2d = pl.pallas_call(
            _scale_half_kernel,
            out_shape=jax.ShapeDtypeStruct((rows, _LANE), dtype),
            grid=(pl.cdiv(rows, block_rows),),
            in_specs=[pl.BlockSpec((block_rows, _LANE), lambda i: (i, 0))],
            out_specs=pl.BlockSpec((block_rows, _LANE), lambda i: (i, 0)),
            compiler_params=pltpu.CompilerParams(
                dimension_semantics=("parallel",)),
        )(x2d)
        return out2d.reshape(1, total)  # contiguous -> metadata-only reshape

    # Small / fallback path: single ungridded full-array VMEM tile.
    # Block shape equals the full array dims, so the (8,128) rule does not apply.
    x_flat = x1.reshape(1, total)
    out = pl.pallas_call(
        _scale_half_kernel,
        out_shape=jax.ShapeDtypeStruct((1, total), dtype),
        in_specs=[pl.BlockSpec((1, total), lambda: (0, 0))],
        out_specs=pl.BlockSpec((1, total), lambda: (0, 0)),
    )(x_flat)
    return out  # already (1, -1); no post-call reshape needed


if __name__ == "__main__":
    # Primary shape from the spec module: (1, 200) f32.
    key = jax.random.PRNGKey(0)
    x1 = jax.random.uniform(key, (1, 200), dtype=jnp.float32)

    y = model_forward(x1)
    jax.block_until_ready(y)

    # Reference: the faithful sigmoid-of-zeros chain (exact match expected).
    ref = (x1.reshape(-1)
           * jax.nn.sigmoid(jnp.zeros((x1.size,), jnp.float32))).reshape(1, -1)
    assert y.shape == (1, 200)
    assert y.dtype == x1.dtype
    assert jnp.array_equal(y, ref), "mismatch vs reference (small path)"

    # Exercise the large-N tiled path (rows=2048, block_rows=1024, grid=(2,)).
    xb = jax.random.uniform(jax.random.PRNGKey(0), (1, _LANE * 2048),
                            dtype=jnp.float32)
    yb = model_forward(xb)
    jax.block_until_ready(yb)
    refb = xb.reshape(1, -1) * jnp.float32(0.5)
    assert yb.shape == refb.shape
    assert jnp.array_equal(yb, refb), "mismatch vs reference (tiled path)"

    print("KERNEL_OK")
</pallas_src>

<mosaic_0001>
module attributes {stable_mosaic.version = 11 : i64} {
  func.func @_scale_half_kernel(%arg0: memref<1x200xf32, #tpu.memory_space<vmem>>, %arg1: memref<1x200xf32, #tpu.memory_space<vmem>>) attributes {dimension_semantics = [], scalar_prefetch = 0 : i64, scratch_operands = 0 : i64, tpu.core_type = #tpu.core_type<tc>} {
    %c0 = arith.constant 0 : index
    %c0_0 = arith.constant 0 : index
    %0 = vector.load %arg0[%c0, %c0_0] : memref<1x200xf32, #tpu.memory_space<vmem>>, vector<1x200xf32>
    %cst = arith.constant 5.000000e-01 : f32
    %1 = vector.broadcast %cst : f32 to vector<1x200xf32>
    %2 = arith.mulf %0, %1 : vector<1x200xf32>
    %c0_1 = arith.constant 0 : index
    %c0_2 = arith.constant 0 : index
    %3 = vector.load %arg1[%c0_1, %c0_2] : memref<1x200xf32, #tpu.memory_space<vmem>>, vector<1x200xf32>
    tpu.vector_store %arg1[%c0_1, %c0_2], %2 {strides = array<i32>} : memref<1x200xf32, #tpu.memory_space<vmem>>, vector<1x200xf32>,
    return
  }
}

</mosaic_0001>

<llo_original>
// kernel: tpu_custom_call.1
$region0: #{tpu_custom_call.1}
  #allocation0 [shape = 'u32[]', space=smem, size = 0x4, offset = 0x4, fixed_abs, tag = 'smem constant byte address 0x4 - core index']
  #allocation1 [shape = 'u32[144,128]{1,0:T(1,128)}', space=vmem, size = 0x12000, scoped, tag = 'internal scratch']
  %s0 = inlined_call_operand.hbm [shape: f32[1,200], index: 0, kind: input, shape index: {}]
  %s1 = inlined_call_operand.hbm [shape: f32[1,200], index: 1, kind: output, shape index: {}]
  %s2 = sld [smem:[#allocation0]]
  $region18: #{tpu_custom_call.1} parent=0
    _
  %s4 = ssub.s32 1, %s2
  %s5 = scalar_select 0, %s4, %s2
  $region1: #{tpu_custom_call.1} parent=0
    #allocation2 [shape = 'u8[1024]{0}', space=vmem, size = 0x400, scoped, tag = 'input window, operand 0, single buffered']
    #allocation3 [shape = 's32[1]{0}', space=sflag, size = 0x4, scoped, tag = 'scoped memory for tpu_custom_call.1']
    #allocation4 [shape = 's32[1]{0}', space=sflag, size = 0x4, scoped, tag = 'scoped memory for tpu_custom_call.1']
    #allocation5 [shape = 'u8[1024]{0}', space=vmem, size = 0x400, scoped, tag = 'output window, operand 0, single buffered']
    %6 = vsyncpa [#allocation3], 0
    %7 = vsyncpa [#allocation4], 0
    // Predicated region
    $region2: #{tpu_custom_call.1} parent=1 // pred_check
      _
    $region3: #{tpu_custom_call.1} parent=1 // pred_check_branch
      %9 = sbr.rel (0) target = $region5
    $region4: #{tpu_custom_call.1} parent=1 // pred_region
      %s11 = ssub.s32 32, 32
      %12 = vsyncadd [#allocation3], %s11
      %s14 = sshll.u32 [#allocation2], 4
      %s15 = int_to_ptr.vmem [resolvable:$true] %s14
      %17 = dma.hbm_to_vmem [thread:$0]  %s0, 32, %s15, [#allocation3]
    $region5: #{tpu_custom_call.1} parent=1 // pred_fallthru
      _
    // Predicated region
    $region6: #{tpu_custom_call.1} parent=1 // pred_check
      _
    $region7: #{tpu_custom_call.1} parent=1 // pred_check_branch
      %19 = sbr.rel (0) target = $region9
    $region8: #{tpu_custom_call.1} parent=1 // pred_region
      %20 = dma.done [#allocation3], 32
    $region9: #{tpu_custom_call.1} parent=1 // pred_fallthru
      _
    %v21 = vld [vmem:[#allocation2] sm:$0x3]
    %v22 = vmul.f32 %v21, 0.5
    %v23 = vlaneseq
    %vm24 = vcmp.ge.s32.totalorder %v23, 0
    %vm25 = vcmp.lt.s32.totalorder %v23, 200
    %vm26 = vmand %vm24, %vm25
    %27 = vst.msk [vmem:[#allocation5] sm:$0x3] %vm26, %v22
    // Predicated region
    $region10: #{tpu_custom_call.1} parent=1 // pred_check
      _
    $region11: #{tpu_custom_call.1} parent=1 // pred_check_branch
      %29 = sbr.rel (0) target = $region13
    $region12: #{tpu_custom_call.1} parent=1 // pred_region
      %s31 = ssub.s32 32, 32
      %32 = vsyncadd [#allocation4], %s31
      %s34 = sshll.u32 [#allocation5], 4
      %s35 = int_to_ptr.vmem [resolvable:$true] %s34
      %37 = dma.vmem_to_hbm [thread:$0]  %s35, 32, %s1, [#allocation4]
    $region13: #{tpu_custom_call.1} parent=1 // pred_fallthru
      _
    // Predicated region
    $region14: #{tpu_custom_call.1} parent=1 // pred_check
      _
    $region15: #{tpu_custom_call.1} parent=1 // pred_check_branch
      %39 = sbr.rel (0) target = $region17
    $region16: #{tpu_custom_call.1} parent=1 // pred_region
      %40 = dma.done [#allocation4], 32
    $region17: #{tpu_custom_call.1} parent=1 // pred_fallthru
      _
    %41 = vsyncpa [#allocation3], 1
    %42 = vsyncpa [#allocation4], 1

</llo_original>
